<compile_context>
chip_gen: v5e
topology: v5e:2x2
jax: 0.10.0
libtpu: 0.0.40
codegen_flags: <defaults>
</compile_context>

<pallas_src>
import functools
import math

import jax
import jax.numpy as jnp
from jax.experimental import pallas as pl
from jax.experimental.pallas import tpu as pltpu


NEG_SLOPE = 0.01  # nn.LeakyReLU default


def _round_up(n, m):
    return ((n + m - 1) // m) * m


def _pick_tile(dim_padded, desired):
    """Largest tile <= desired dividing dim_padded (a 128-multiple); prefer 256-multiples."""
    desired = max(128, min(desired, dim_padded))
    for quantum in (256, 128):
        if dim_padded % quantum:
            continue
        t = (desired // quantum) * quantum
        while t >= quantum:
            if dim_padded % t == 0:
                return t
            t -= quantum
    return dim_padded


def _vmem_capacity_bytes():
    try:
        return int(pltpu.get_tpu_info().vmem_capacity_bytes)
    except Exception:
        return 64 * 1024 * 1024  # conservative (v7x per-TC VMEM)


def _fc_epilogue(y, b_ref, xs_ref, o_ref):
    y = y + b_ref[...].astype(jnp.float32)           # bias, broadcast over rows
    # TODO(synk): Dropout is identity in eval mode; training-mode dropout
    # (pltpu.prng_seed + prng_random_bits mask) intentionally not implemented.
    y = jnp.where(y > 0, y, NEG_SLOPE * y)            # LeakyReLU
    if xs_ref is not None:
        y = y + xs_ref[...].astype(jnp.float32)       # residual add
    o_ref[...] = y.astype(o_ref.dtype)


def _fc_kernel_1k(*refs, skip_mode, compute_dtype):
    """Single K-tile variant: 2-D grid, no accumulator scratch."""
    if skip_mode == 1:
        x_ref, w_ref, b_ref, xs_ref, o_ref = refs
    else:
        x_ref, w_ref, b_ref, o_ref = refs
        xs_ref = x_ref if skip_mode == 2 else None     # reuse x tile as the residual
    x = x_ref[...]
    w = w_ref[...]
    if compute_dtype is not None:
        x = x.astype(compute_dtype)
        w = w.astype(compute_dtype)
    y = jnp.dot(x, w, preferred_element_type=jnp.float32)
    _fc_epilogue(y, b_ref, xs_ref, o_ref)


def _fc_kernel_multik(*refs, skip_mode, compute_dtype):
    """Multi K-tile variant: 3-D grid with f32 VMEM accumulator."""
    if skip_mode == 1:
        x_ref, w_ref, b_ref, xs_ref, o_ref, acc_ref = refs
    else:
        x_ref, w_ref, b_ref, o_ref, acc_ref = refs
        xs_ref = None
    k = pl.program_id(2)

    @pl.when(k == 0)
    def _():
        acc_ref[...] = jnp.zeros_like(acc_ref)

    x = x_ref[...]
    w = w_ref[...]
    if compute_dtype is not None:
        x = x.astype(compute_dtype)
        w = w.astype(compute_dtype)
    acc_ref[...] += jnp.dot(x, w, preferred_element_type=jnp.float32)

    @pl.when(k == pl.num_programs(2) - 1)
    def _():
        _fc_epilogue(acc_ref[...], b_ref, xs_ref, o_ref)


def prepare_fc_params(w, b):
    """Pad Linear params ONCE (outside the per-call forward path).

    w: (D_in, D_out) -- pre-transposed from PyTorch's (out, in) layout.
    b: (D_out,)
    Returns (w_p, b_p) with feature dims zero-padded to multiples of 128 and bias
    reshaped to a (1, D_out_p) row.
    """
    D_in, D_out = w.shape
    D_in_p, D_out_p = _round_up(D_in, 128), _round_up(D_out, 128)
    if D_in_p != D_in or D_out_p != D_out:
        w = jnp.pad(w, ((0, D_in_p - D_in), (0, D_out_p - D_out)))
    if D_out_p != D_out:
        b = jnp.pad(b, (0, D_out_p - D_out))
    return w, b.reshape(1, D_out_p)


def fully_connected_block(x, w_p, b_p, d_out, *, skip_connection=True,
                          compute_dtype=None, bm=512, tn=512, tk=2048):
    """x: (B, D_in).  w_p/b_p: outputs of prepare_fc_params.  Returns (B, d_out)."""
    B, D_in = x.shape
    D_in_p, D_out_p = w_p.shape
    if skip_connection and D_in != d_out:
        raise ValueError("In and out channels must be identical to use skip connections")
    assert D_in <= D_in_p and d_out <= D_out_p and b_p.shape == (1, D_out_p)

    # Zero-pad x along K only (zeros contribute nothing to the matmul).
    x_p = x if D_in_p == D_in else jnp.pad(x, ((0, 0), (0, D_in_p - D_in)))

    itemsize = jnp.dtype(x.dtype).itemsize
    vmem_cap = _vmem_capacity_bytes()
    budget = int(0.45 * vmem_cap)       # double-buffered working set must fit here

    # --- initial tile picks -------------------------------------------------
    bm = max(8, (min(bm, _round_up(B, 8)) // 8) * 8)
    tk = _pick_tile(D_in_p, tk)         # as large as possible (ideally full K)
    tn = _pick_tile(D_out_p, tn)

    def buffers_bytes(bm_, tn_, tk_):
        nk_ = D_in_p // tk_
        nj_ = D_out_p // tn_
        sep_res = skip_connection and not (nk_ == 1 and nj_ == 1 and tk_ == tn_)
        b = 0
        b += 2 * bm_ * tk_ * itemsize            # x tile, double-buffered
        b += 2 * tk_ * tn_ * itemsize            # w tile
        b += 2 * 8 * tn_ * itemsize              # bias row (sublane-padded)
        b += 2 * bm_ * tn_ * itemsize            # output tile
        if sep_res:
            b += 2 * bm_ * tn_ * itemsize        # residual tile
        if nk_ > 1:
            b += bm_ * tn_ * 4                   # f32 accumulator scratch
        return b

    # Shrink tiles until the working set fits the VMEM budget (matters on v7x: 64 MiB).
    while buffers_bytes(bm, tn, tk) > budget:
        if tk > 512:
            tk = _pick_tile(D_in_p, tk // 2)
        elif bm > 128:
            bm = max(128, (bm // 2 // 8) * 8)
        elif tn > 256:
            tn = _pick_tile(D_out_p, tn // 2)
        elif tk > 128:
            tk = _pick_tile(D_in_p, tk // 2)
        elif bm > 8:
            bm = max(8, (bm // 2 // 8) * 8)
        else:
            break

    ni, nj, nk = pl.cdiv(B, bm), D_out_p // tn, D_in_p // tk

    # v7x has 2 TensorCores: for non-trivial problems make sure the parallel (i, j)
    # sub-grid has >= 2 tiles so both cores get work (harmless on v5e/v6e).
    if ni * nj == 1 and B * D_out_p * itemsize >= (1 << 20):
        x_bytes = B * D_in_p * itemsize
        w_bytes = D_in_p * D_out_p * itemsize
        if w_bytes <= x_bytes and B > 8:
            bm = max(8, _round_up(pl.cdiv(B, 2), 8))          # split M (re-reads w)
        elif D_out_p // 128 >= 2:
            tn = _pick_tile(D_out_p, max(128, tn // 2))        # split N (re-reads x)
        elif B > 8:
            bm = max(8, _round_up(pl.cdiv(B, 2), 8))
        ni, nj = pl.cdiv(B, bm), D_out_p // tn

    # Residual handling: reuse the x tile when it coincides with the output tile.
    reuse_x_as_skip = (skip_connection and nk == 1 and nj == 1
                       and tk == tn and D_in_p == D_out_p)
    skip_mode = 0 if not skip_connection else (2 if reuse_x_as_skip else 1)

    multi_k = nk > 1
    if multi_k:
        grid = (ni, nj, nk)
        x_spec = pl.BlockSpec((bm, tk), lambda i, j, k: (i, k))
        # TODO(synk): if profiling shows exposed DMA on large weight tiles, add
        # pipeline_mode=pl.Buffered(3) here (check VMEM headroom on v7x).
        w_spec = pl.BlockSpec((tk, tn), lambda i, j, k: (k, j))
        b_spec = pl.BlockSpec((1, tn), lambda i, j, k: (0, j))
        res_spec = pl.BlockSpec((bm, tn), lambda i, j, k: (i, j))
        o_spec = pl.BlockSpec((bm, tn), lambda i, j, k: (i, j))
        scratch = [pltpu.VMEM((bm, tn), jnp.float32)]
        dims = ("parallel", "parallel", "arbitrary")
        kernel = functools.partial(_fc_kernel_multik, skip_mode=skip_mode,
                                   compute_dtype=compute_dtype)
    else:
        grid = (ni, nj)
        x_spec = pl.BlockSpec((bm, tk), lambda i, j: (i, 0))
        w_spec = pl.BlockSpec((tk, tn), lambda i, j: (0, j))
        b_spec = pl.BlockSpec((1, tn), lambda i, j: (0, j))
        res_spec = pl.BlockSpec((bm, tn), lambda i, j: (i, j))
        o_spec = pl.BlockSpec((bm, tn), lambda i, j: (i, j))
        scratch = []
        dims = ("parallel", "parallel")
        kernel = functools.partial(_fc_kernel_1k, skip_mode=skip_mode,
                                   compute_dtype=compute_dtype)

    in_specs = [x_spec, w_spec, b_spec]
    inputs = [x_p, w_p, b_p]
    if skip_mode == 1:
        in_specs.append(res_spec)
        inputs.append(x_p)

    def _nbytes(a):
        return int(math.prod(a.shape)) * jnp.dtype(a.dtype).itemsize

    cost = pl.CostEstimate(
        flops=2 * B * D_in_p * D_out_p,
        transcendentals=0,
        bytes_accessed=(
            _nbytes(x_p) * nj                      # x re-streamed once per N tile
            + _nbytes(w_p) * ni                    # w re-streamed once per M tile
            + _nbytes(b_p) * ni
            + (_nbytes(x_p) if skip_mode == 1 else 0)
            + B * d_out * itemsize                 # output write
        ),
    )

    vmem_limit = min(int(vmem_cap * 0.8),
                     max(32 * 1024 * 1024, buffers_bytes(bm, tn, tk) + (8 << 20)))

    # Output is emitted UNPADDED: the ragged final N (and M) tile is a masked store,
    # which avoids the post-kernel HBM slice copy of the whole output.
    return pl.pallas_call(
        kernel,
        out_shape=jax.ShapeDtypeStruct((B, d_out), x.dtype),
        grid_spec=pltpu.PrefetchScalarGridSpec(
            num_scalar_prefetch=0,
            grid=grid,
            in_specs=in_specs,
            out_specs=o_spec,
            scratch_shapes=scratch,
        ),
        compiler_params=pltpu.CompilerParams(
            dimension_semantics=dims,
            vmem_limit_bytes=vmem_limit,
        ),
        cost_estimate=cost,
    )(*inputs)


def reference(x, w, b, *, skip_connection=True):
    y = jnp.dot(x, w, precision=jax.lax.Precision.HIGHEST) + b
    y = jnp.where(y > 0, y, NEG_SLOPE * y)
    if skip_connection:
        y = y + x
    return y


if __name__ == "__main__":
    key = jax.random.PRNGKey(0)
    kx, kw, kb, kx2, kw2, kb2 = jax.random.split(key, 6)

    # Tolerance note: the kernel uses the MXU default matmul precision; the reference
    # is computed at HIGHEST. A modest tolerance covers bf16-pass rounding differences
    # while still catching any real bug (missing bias/activation/skip >> 2e-2).
    ATOL = RTOL = 2e-2

    # Case 1: skip connection (in_channels == out_channels), small shapes.
    B, D = 8, 32
    x = jax.random.normal(kx, (B, D), dtype=jnp.float32)
    bound = 1.0 / jnp.sqrt(D)
    w = jax.random.uniform(kw, (D, D), minval=-bound, maxval=bound, dtype=jnp.float32)
    b = jax.random.uniform(kb, (D,), minval=-bound, maxval=bound, dtype=jnp.float32)

    w_p, b_p = prepare_fc_params(w, b)          # padded once, outside the forward path
    out = jax.block_until_ready(
        fully_connected_block(x, w_p, b_p, D, skip_connection=True))
    ref = reference(x, w, b, skip_connection=True)
    assert out.shape == (B, D)
    assert jnp.allclose(out, ref, atol=ATOL, rtol=RTOL), "mismatch vs reference (skip)"

    # Case 2: no skip, D_in != D_out — exercises K padding, N padding + masked tail store.
    B2, Din2, Dout2 = 40, 96, 160
    x2 = jax.random.normal(kx2, (B2, Din2), dtype=jnp.float32)
    bound2 = 1.0 / jnp.sqrt(Din2)
    w2 = jax.random.uniform(kw2, (Din2, Dout2), minval=-bound2, maxval=bound2,
                            dtype=jnp.float32)
    b2 = jax.random.uniform(kb2, (Dout2,), minval=-bound2, maxval=bound2,
                            dtype=jnp.float32)

    w2_p, b2_p = prepare_fc_params(w2, b2)
    out2 = jax.block_until_ready(
        fully_connected_block(x2, w2_p, b2_p, Dout2, skip_connection=False))
    ref2 = reference(x2, w2, b2, skip_connection=False)
    assert out2.shape == (B2, Dout2)
    assert jnp.allclose(out2, ref2, atol=ATOL, rtol=RTOL), "mismatch vs reference (no skip)"

    print("KERNEL_OK")
</pallas_src>

<mosaic_0001>
module attributes {stable_mosaic.version = 11 : i64} {
  func.func @_fc_kernel_1k(%arg0: i32, %arg1: i32, %arg2: memref<8x128xf32, #tpu.memory_space<vmem>>, %arg3: memref<128x128xf32, #tpu.memory_space<vmem>>, %arg4: memref<1x128xf32, #tpu.memory_space<vmem>>, %arg5: memref<8x128xf32, #tpu.memory_space<vmem>>) attributes {dimension_semantics = [#tpu.dimension_semantics<parallel>, #tpu.dimension_semantics<parallel>], iteration_bounds = array<i64: 1, 1>, scalar_prefetch = 0 : i64, scratch_operands = 0 : i64, tpu.core_type = #tpu.core_type<tc>, window_params = [{transform_indices = @transform_0, window_bounds = array<i64: 8, 128>}, {transform_indices = @transform_1, window_bounds = array<i64: 128, 128>}, {transform_indices = @transform_2, window_bounds = array<i64: 1, 128>}, {transform_indices = @transform_3, window_bounds = array<i64: 8, 128>}]} {
    %c0 = arith.constant 0 : index
    %c0_0 = arith.constant 0 : index
    %0 = vector.load %arg2[%c0, %c0_0] : memref<8x128xf32, #tpu.memory_space<vmem>>, vector<8x128xf32>
    %c0_1 = arith.constant 0 : index
    %c0_2 = arith.constant 0 : index
    %1 = vector.load %arg3[%c0_1, %c0_2] : memref<128x128xf32, #tpu.memory_space<vmem>>, vector<128x128xf32>
    %cst = arith.constant dense<0.000000e+00> : vector<8x128xf32>
    %2 = tpu.matmul %0, %1, %cst {dimension_numbers = #tpu.dot_dimension_numbers<[1], [0], [0], [1], [0, 0, 1, 1], [], []>} : vector<8x128xf32>, vector<128x128xf32>, vector<8x128xf32> -> vector<8x128xf32>
    %c0_3 = arith.constant 0 : index
    %c0_4 = arith.constant 0 : index
    %3 = vector.load %arg4[%c0_3, %c0_4] : memref<1x128xf32, #tpu.memory_space<vmem>>, vector<1x128xf32>
    %4 = vector.broadcast %3 : vector<1x128xf32> to vector<8x128xf32>
    %5 = arith.addf %2, %4 : vector<8x128xf32>
    %cst_5 = arith.constant 0.000000e+00 : f32
    %6 = vector.broadcast %cst_5 : f32 to vector<8x128xf32>
    %7 = arith.cmpf ogt, %5, %6 : vector<8x128xf32>
    %cst_6 = arith.constant 0.00999999977 : f32
    %8 = vector.broadcast %cst_6 : f32 to vector<8x128xf32>
    %9 = arith.mulf %8, %5 : vector<8x128xf32>
    %10 = arith.select %7, %5, %9 : vector<8x128xi1>, vector<8x128xf32>
    %c0_7 = arith.constant 0 : index
    %c0_8 = arith.constant 0 : index
    %11 = vector.load %arg2[%c0_7, %c0_8] : memref<8x128xf32, #tpu.memory_space<vmem>>, vector<8x128xf32>
    %12 = arith.addf %10, %11 : vector<8x128xf32>
    %c0_9 = arith.constant 0 : index
    %c0_10 = arith.constant 0 : index
    %13 = vector.load %arg5[%c0_9, %c0_10] : memref<8x128xf32, #tpu.memory_space<vmem>>, vector<8x128xf32>
    tpu.vector_store %arg5[%c0_9, %c0_10], %12 {strides = array<i32>} : memref<8x128xf32, #tpu.memory_space<vmem>>, vector<8x128xf32>,
    return
  }
  func.func @transform_0(%arg0: i32, %arg1: i32) -> (i32, i32) {
    %c0_i32 = arith.constant 0 : i32
    %c0_i32_0 = arith.constant 0 : i32
    return %arg0, %c0_i32 : i32, i32
  }
  func.func @transform_1(%arg0: i32, %arg1: i32) -> (i32, i32) {
    %c0_i32 = arith.constant 0 : i32
    %c0_i32_0 = arith.constant 0 : i32
    return %c0_i32, %arg1 : i32, i32
  }
  func.func @transform_2(%arg0: i32, %arg1: i32) -> (i32, i32) {
    %c0_i32 = arith.constant 0 : i32
    %c0_i32_0 = arith.constant 0 : i32
    return %c0_i32, %arg1 : i32, i32
  }
  func.func @transform_3(%arg0: i32, %arg1: i32) -> (i32, i32) {
    %c0_i32 = arith.constant 0 : i32
    return %arg0, %arg1 : i32, i32
  }
}

</mosaic_0001>

<llo_original>
// kernel: tpu_custom_call.1
$region0: #{tpu_custom_call.1}
  #allocation0 [shape = 'u32[]', space=smem, size = 0x4, offset = 0x4, fixed_abs, tag = 'smem constant byte address 0x4 - core index']
  #allocation1 [shape = 'u32[72,128]{1,0:T(1,128)}', space=vmem, size = 0x9000, scoped, tag = 'internal scratch']
  %s0 = inlined_call_operand.hbm [shape: f32[8,128], index: 0, kind: input, shape index: {}]
  %s1 = inlined_call_operand.hbm [shape: f32[128,128], index: 1, kind: input, shape index: {}]
  %s2 = inlined_call_operand.vmem [shape: f32[1,128], index: 2, kind: input, shape index: {}]
  %s3 = inlined_call_operand.hbm [shape: f32[8,32], index: 3, kind: output, shape index: {}]
  %s4 = sld [smem:[#allocation0]]
  $region30: #{tpu_custom_call.1} parent=0
    _
  %s6 = ssub.s32 1, %s4
  %s7 = scalar_select 0, %s6, %s4
  $region1: #{tpu_custom_call.1} parent=0
    #allocation2 [shape = 'u8[4096]{0}', space=vmem, size = 0x1000, scoped, tag = 'input window, operand 0, single buffered']
    #allocation3 [shape = 's32[1]{0}', space=sflag, size = 0x4, scoped, tag = 'scoped memory for tpu_custom_call.1']
    #allocation4 [shape = 's32[1]{0}', space=sflag, size = 0x4, scoped, tag = 'scoped memory for tpu_custom_call.1']
    #allocation5 [shape = 'u8[65536]{0}', space=vmem, size = 0x10000, scoped, tag = 'input window, operand 1, single buffered']
    #allocation6 [shape = 's32[1]{0}', space=sflag, size = 0x4, scoped, tag = 'scoped memory for tpu_custom_call.1']
    #allocation7 [shape = 'u8[4096]{0}', space=vmem, size = 0x1000, scoped, tag = 'output window, operand 0, single buffered']
    %8 = vsyncpa [#allocation3], 0
    %9 = vsyncpa [#allocation6], 0
    %10 = vsyncpa [#allocation4], 0
    // Predicated region
    $region2: #{tpu_custom_call.1} parent=1 // pred_check
      _
    $region3: #{tpu_custom_call.1} parent=1 // pred_check_branch
      %12 = sbr.rel (0) target = $region5
    $region4: #{tpu_custom_call.1} parent=1 // pred_region
      %14 = vsyncadd [#allocation3], 0
      %s16 = sshll.u32 %s0, 4
      %s17 = int_to_ptr.hbm [resolvable:$true] %s16
      %s18 = sshll.u32 [#allocation2], 4
      %s19 = int_to_ptr.vmem [resolvable:$true] %s18
      %21 = dma.hbm_to_vmem [thread:$0]  %s17, 128, %s19, [#allocation3]
    $region5: #{tpu_custom_call.1} parent=1 // pred_fallthru
      _
    // Predicated region
    $region6: #{tpu_custom_call.1} parent=1 // pred_check
      _
    $region7: #{tpu_custom_call.1} parent=1 // pred_check_branch
      %23 = sbr.rel (0) target = $region9
    $region8: #{tpu_custom_call.1} parent=1 // pred_region
      %25 = vsyncadd [#allocation6], 0
      %s26 = sshll.u32 %s1, 4
      %s27 = int_to_ptr.hbm [resolvable:$true] %s26
      %s28 = sshll.u32 [#allocation5], 4
      %s29 = int_to_ptr.vmem [resolvable:$true] %s28
      %34 = dma.hbm_to_vmem [thread:$0]  %s27, 2048, %s29, [#allocation6], 128, 128, 8
    $region9: #{tpu_custom_call.1} parent=1 // pred_fallthru
      _
    // Predicated region
    $region10: #{tpu_custom_call.1} parent=1 // pred_check
      _
    $region11: #{tpu_custom_call.1} parent=1 // pred_check_branch
      %36 = sbr.rel (0) target = $region13
    $region12: #{tpu_custom_call.1} parent=1 // pred_region
      _
    $region13: #{tpu_custom_call.1} parent=1 // pred_fallthru
      _
    // Predicated region
    $region14: #{tpu_custom_call.1} parent=1 // pred_check
      _
    $region15: #{tpu_custom_call.1} parent=1 // pred_check_branch
      %38 = sbr.rel (0) target = $region17
    $region16: #{tpu_custom_call.1} parent=1 // pred_region
      %40 = dma.done [#allocation3], 128
    $region17: #{tpu_custom_call.1} parent=1 // pred_fallthru
      _
    // Predicated region
    $region18: #{tpu_custom_call.1} parent=1 // pred_check
      _
    $region19: #{tpu_custom_call.1} parent=1 // pred_check_branch
      %42 = sbr.rel (0) target = $region21
    $region20: #{tpu_custom_call.1} parent=1 // pred_region
      %44 = dma.done [#allocation6], 2048
    $region21: #{tpu_custom_call.1} parent=1 // pred_fallthru
      _
    %v45 = vld [vmem:[#allocation2] sm:$0xff]
    %v46 = vld [vmem:[#allocation5] sm:$0xff]
    %v47 = vld [vmem:[#allocation5 + $0x8] sm:$0xff]
    %v48 = vld [vmem:[#allocation5 + $0x10] sm:$0xff]
    %v49 = vld [vmem:[#allocation5 + $0x18] sm:$0xff]
    %v50 = vld [vmem:[#allocation5 + $0x20] sm:$0xff]
    %v51 = vld [vmem:[#allocation5 + $0x28] sm:$0xff]
    %v52 = vld [vmem:[#allocation5 + $0x30] sm:$0xff]
    %v53 = vld [vmem:[#allocation5 + $0x38] sm:$0xff]
    %v54 = vld [vmem:[#allocation5 + $0x40] sm:$0xff]
    %v55 = vld [vmem:[#allocation5 + $0x48] sm:$0xff]
    %v56 = vld [vmem:[#allocation5 + $0x50] sm:$0xff]
    %v57 = vld [vmem:[#allocation5 + $0x58] sm:$0xff]
    %v58 = vld [vmem:[#allocation5 + $0x60] sm:$0xff]
    %v59 = vld [vmem:[#allocation5 + $0x68] sm:$0xff]
    %v60 = vld [vmem:[#allocation5 + $0x70] sm:$0xff]
    %v61 = vld [vmem:[#allocation5 + $0x78] sm:$0xff]
    %v62 = vld [vmem:[%s2] sm:$0x1]
    %v64 = vperm.slane %v62, 0
    %66 = vmatpush.msra.mxu0 %v61
    %67 = vmatpush.msra.mxu0 %v60
    %68 = vmatpush.msra.mxu0 %v59
    %69 = vmatpush.msra.mxu0 %v58
    %70 = vmatpush.msra.mxu0 %v57
    %71 = vmatpush.msra.mxu0 %v56
    %72 = vmatpush.msra.mxu0 %v55
    %73 = vmatpush.msra.mxu0 %v54
    %74 = vmatpush.msra.mxu0 %v53
    %75 = vmatpush.msra.mxu0 %v52
    %76 = vmatpush.msra.mxu0 %v51
    %77 = vmatpush.msra.mxu0 %v50
    %78 = vmatpush.msra.mxu0 %v49
    %79 = vmatpush.msra.mxu0 %v48
    %80 = vmatpush.msra.mxu0 %v47
    %81 = vmatpush.msra.mxu0 %v46
    %82 = vmatmul.f32.gmra.mxu0 %v45
    %v83 = vpop.f32.mrf.mxu0
    %v84 = vadd.f32 %v64, %v83
    %85 = vdwg.mxu0
    %vm86 = vcmp.gt.f32.partialorder %v84, 0.0
    %v87 = vmul.f32 %v84, 0.01
    %v88 = vsel %vm86, %v84, %v87
    %v89 = vadd.f32 %v88, %v45
    %90 = vst [vmem:[#allocation7] sm:$0xff] %v89
    // Predicated region
    $region22: #{tpu_custom_call.1} parent=1 // pred_check
      _
    $region23: #{tpu_custom_call.1} parent=1 // pred_check_branch
      %92 = sbr.rel (0) target = $region25
    $region24: #{tpu_custom_call.1} parent=1 // pred_region
      %94 = vsyncadd [#allocation4], 0
      %s96 = sshll.u32 [#allocation7], 4
      %s97 = int_to_ptr.vmem [resolvable:$true] %s96
      %s98 = sshll.u32 %s3, 4
      %s99 = int_to_ptr.hbm [resolvable:$true] %s98
      %101 = dma.vmem_to_hbm [thread:$0]  %s97, 128, %s99, [#allocation4]
    $region25: #{tpu_custom_call.1} parent=1 // pred_fallthru
      _
    // Predicated region
    $region26: #{tpu_custom_call.1} parent=1 // pred_check
      _
    $region27: #{tpu_custom_call.1} parent=1 // pred_check_branch
      %103 = sbr.rel (0) target = $region29
    $region28: #{tpu_custom_call.1} parent=1 // pred_region
      %105 = dma.done [#allocation4], 128
    $region29: #{tpu_custom_call.1} parent=1 // pred_fallthru
      _
    %106 = vsyncpa [#allocation3], 1
    %107 = vsyncpa [#allocation6], 1
    %108 = vsyncpa [#allocation4], 1

</llo_original>
